<compile_context>
chip_gen: v7x
topology: tpu7x:2x2x1
jax: 0.10.0
libtpu: 0.0.40
codegen_flags: <defaults>
</compile_context>

<pallas_src>
import functools

import jax
import jax.numpy as jnp
from jax.experimental import pallas as pl
from jax.experimental.pallas import tpu as pltpu


def _round_up(x, m):
    return (x + m - 1) // m * m


def _pick_seq_tile(length, target):
    """Largest tile <= target that divides `length` and is a multiple of 8,
    else the full length (full-extent blocks are always legal)."""
    if length <= target:
        return length
    for t in range(target, 7, -1):
        if length % t == 0 and t % 8 == 0:
            return t
    return length


def _pick_batch_tile(batch, tq, row_budget=512):
    """Pack several batch elements per grid step when per-batch tiles are small."""
    upper = min(batch, max(1, row_budget // max(tq, 1)))
    for tb in range(upper, 0, -1):
        if batch % tb == 0:
            return tb
    return 1


def _flash_sdpa_kernel(q_ref, k_ref, v_ref, o_ref, m_sc, l_sc, acc_sc, *, scale):
    # q_ref:(tb,tq,Dp) k_ref:(tb,tk,Dp) v_ref:(tb,tk,Dvp) o_ref:(tb,tq,Dvp)
    # scratch: m_sc/l_sc:(tb,tq,1) f32, acc_sc:(tb,tq,Dvp) f32
    kv = pl.program_id(2)

    @pl.when(kv == 0)
    def _init():
        m_sc[...] = jnp.full_like(m_sc, -jnp.inf)
        l_sc[...] = jnp.zeros_like(l_sc)
        acc_sc[...] = jnp.zeros_like(acc_sc)

    # Scale the small (tb,tq,Dp) q tile, not the (tb,tq,tk) scores.
    q = q_ref[...]
    q = q * jnp.asarray(scale, dtype=q.dtype)

    # QK^T: contraction over the shared last dim (no in-kernel transpose),
    # native-dtype MXU operands with f32 accumulation.
    s = jnp.einsum(
        "bqd,bkd->bqk", q, k_ref[...], preferred_element_type=jnp.float32
    )  # (tb, tq, tk) f32

    # Online softmax update (all stats in f32).
    m_prev = m_sc[...]
    m_new = jnp.maximum(m_prev, jnp.max(s, axis=-1, keepdims=True))
    alpha = jnp.exp(m_prev - m_new)
    p = jnp.exp(s - m_new)

    l_sc[...] = alpha * l_sc[...] + jnp.sum(p, axis=-1, keepdims=True)
    acc_sc[...] = alpha * acc_sc[...] + jnp.einsum(
        "bqk,bkd->bqd",
        p.astype(v_ref.dtype),
        v_ref[...],
        preferred_element_type=jnp.float32,
    )
    m_sc[...] = m_new

    # TODO(synk): dropout with attention_dropout > 0.0 would need pltpu.prng_* masking
    # of p; the module default (p=0.0 / eval) is an identity, so it is omitted.

    @pl.when(kv == pl.num_programs(2) - 1)
    def _finalize():
        inv_l = pl.reciprocal(l_sc[...], approx=True)  # EUP vrcp, once per q tile
        o_ref[...] = (acc_sc[...] * inv_l).astype(o_ref.dtype)


def scaled_dot_product_attention(q, k, v, *, tq_target=512, tk_target=512):
    """q:(B, Lq, D), k:(B, Lk, D), v:(B, Lk, Dv) -> (B, Lq, Dv)"""
    B, Lq, D = q.shape
    _, Lk, Dv = v.shape
    assert k.shape == (B, Lk, D)

    # Scale uses the ORIGINAL head dim (matches torch: q.size(-1) ** -0.5).
    scale = float(D) ** -0.5

    # Lane-dense feature dims: pad D / Dv to multiples of 128. Zero-padded q/k
    # features contribute 0 to the scores; padded Dv columns are sliced off.
    Dp = _round_up(D, 128)
    Dvp = _round_up(Dv, 128)
    if Dp != D:
        q = jnp.pad(q, ((0, 0), (0, 0), (0, Dp - D)))
        k = jnp.pad(k, ((0, 0), (0, 0), (0, Dp - D)))
    if Dvp != Dv:
        v = jnp.pad(v, ((0, 0), (0, 0), (0, Dvp - Dv)))

    # Tile sizes: safe on v7x's 64 MiB VMEM and good on v5e/v6e.
    tq = _pick_seq_tile(Lq, tq_target)
    tk = _pick_seq_tile(Lk, tk_target)
    tb = _pick_batch_tile(B, tq)
    grid = (B // tb, Lq // tq, Lk // tk)

    kernel = functools.partial(_flash_sdpa_kernel, scale=scale)

    bytes_accessed = (
        q.size * q.dtype.itemsize
        + k.size * k.dtype.itemsize
        + v.size * v.dtype.itemsize
        + B * Lq * Dvp * q.dtype.itemsize
    )
    cost = pl.CostEstimate(
        flops=2 * B * Lq * Lk * (D + Dv),
        transcendentals=B * Lq * Lk,
        bytes_accessed=bytes_accessed,
    )

    out = pl.pallas_call(
        kernel,
        out_shape=jax.ShapeDtypeStruct((B, Lq, Dvp), q.dtype),
        grid_spec=pltpu.PrefetchScalarGridSpec(
            num_scalar_prefetch=0,
            grid=grid,
            in_specs=[
                pl.BlockSpec((tb, tq, Dp), lambda b, qi, ki: (b, qi, 0)),
                pl.BlockSpec((tb, tk, Dp), lambda b, qi, ki: (b, ki, 0)),
                pl.BlockSpec((tb, tk, Dvp), lambda b, qi, ki: (b, ki, 0)),
            ],
            out_specs=pl.BlockSpec((tb, tq, Dvp), lambda b, qi, ki: (b, qi, 0)),
            scratch_shapes=[
                pltpu.VMEM((tb, tq, 1), jnp.float32),    # running max m
                pltpu.VMEM((tb, tq, 1), jnp.float32),    # running denom l
                pltpu.VMEM((tb, tq, Dvp), jnp.float32),  # output accumulator
            ],
        ),
        compiler_params=pltpu.CompilerParams(
            dimension_semantics=("parallel", "parallel", "arbitrary"),
            vmem_limit_bytes=32 * 1024 * 1024,
        ),
        cost_estimate=cost,
    )(q, k, v)

    if Dvp != Dv:
        out = out[..., :Dv]
    return out


def _reference(q, k, v):
    scale = q.shape[-1] ** -0.5
    attn = jnp.einsum("bqd,bkd->bqk", q, k) * scale
    attn = jax.nn.softmax(attn, axis=2)
    return jnp.einsum("bqk,bkd->bqd", attn, v)


if __name__ == "__main__":
    key = jax.random.PRNGKey(0)
    kq, kk, kv = jax.random.split(key, 3)

    # Small shape matching the module's bmm layout.
    B, Lq, Lk, D, Dv = 2, 8, 8, 32, 32
    q = jax.random.normal(kq, (B, Lq, D), dtype=jnp.float32)
    k = jax.random.normal(kk, (B, Lk, D), dtype=jnp.float32)
    v = jax.random.normal(kv, (B, Lk, Dv), dtype=jnp.float32)

    out = scaled_dot_product_attention(q, k, v)
    out = jax.block_until_ready(out)
    ref = _reference(q, k, v)
    assert out.shape == (B, Lq, Dv)
    assert jnp.allclose(out, ref, atol=2e-3, rtol=2e-3), "mismatch vs reference (small)"

    # Exercise the multi-tile online-softmax path (grid over q- and k-tiles).
    B2, L2 = 2, 256
    q2 = jax.random.normal(kq, (B2, L2, D), dtype=jnp.float32)
    k2 = jax.random.normal(kk, (B2, L2, D), dtype=jnp.float32)
    v2 = jax.random.normal(kv, (B2, L2, Dv), dtype=jnp.float32)
    out2 = scaled_dot_product_attention(q2, k2, v2, tq_target=128, tk_target=128)
    out2 = jax.block_until_ready(out2)
    ref2 = _reference(q2, k2, v2)
    assert out2.shape == (B2, L2, Dv)
    assert jnp.allclose(out2, ref2, atol=2e-3, rtol=2e-3), "mismatch vs reference (tiled)"

    print("KERNEL_OK")
</pallas_src>

<mosaic_0001>
module attributes {stable_mosaic.version = 11 : i64} {
  func.func @_flash_sdpa_kernel(%arg0: i32, %arg1: i32, %arg2: i32, %arg3: memref<2x8x128xf32, #tpu.memory_space<vmem>>, %arg4: memref<2x8x128xf32, #tpu.memory_space<vmem>>, %arg5: memref<2x8x128xf32, #tpu.memory_space<vmem>>, %arg6: memref<2x8x128xf32, #tpu.memory_space<vmem>>, %arg7: memref<2x8x1xf32, #tpu.memory_space<vmem>>, %arg8: memref<2x8x1xf32, #tpu.memory_space<vmem>>, %arg9: memref<2x8x128xf32, #tpu.memory_space<vmem>>) attributes {dimension_semantics = [#tpu.dimension_semantics<parallel>, #tpu.dimension_semantics<parallel>, #tpu.dimension_semantics<arbitrary>], iteration_bounds = array<i64: 1, 1, 1>, scalar_prefetch = 0 : i64, scratch_operands = 3 : i64, tpu.core_type = #tpu.core_type<tc>, window_params = [{transform_indices = @transform_0, window_bounds = array<i64: 2, 8, 128>}, {transform_indices = @transform_1, window_bounds = array<i64: 2, 8, 128>}, {transform_indices = @transform_2, window_bounds = array<i64: 2, 8, 128>}, {transform_indices = @transform_3, window_bounds = array<i64: 2, 8, 128>}]} {
    %c0_i32 = arith.constant 0 : i32
    %0 = arith.cmpi eq, %arg2, %c0_i32 : i32
    %1 = arith.extui %0 : i1 to i32
    %c0_i32_0 = arith.constant 0 : i32
    %2 = arith.cmpi ne, %1, %c0_i32_0 : i32
    scf.if %2 {
      %cst_33 = arith.constant 0xFF800000 : f32
      %34 = vector.broadcast %cst_33 : f32 to vector<2x8x1xf32>
      %c0_34 = arith.constant 0 : index
      %c0_35 = arith.constant 0 : index
      %c0_36 = arith.constant 0 : index
      %35 = vector.load %arg7[%c0_34, %c0_35, %c0_36] : memref<2x8x1xf32, #tpu.memory_space<vmem>>, vector<2x8x1xf32>
      tpu.vector_store %arg7[%c0_34, %c0_35, %c0_36], %34 {strides = array<i32>} : memref<2x8x1xf32, #tpu.memory_space<vmem>>, vector<2x8x1xf32>,
      %cst_37 = arith.constant 0.000000e+00 : f32
      %36 = vector.broadcast %cst_37 : f32 to vector<2x8x1xf32>
      %c0_38 = arith.constant 0 : index
      %c0_39 = arith.constant 0 : index
      %c0_40 = arith.constant 0 : index
      %37 = vector.load %arg8[%c0_38, %c0_39, %c0_40] : memref<2x8x1xf32, #tpu.memory_space<vmem>>, vector<2x8x1xf32>
      tpu.vector_store %arg8[%c0_38, %c0_39, %c0_40], %36 {strides = array<i32>} : memref<2x8x1xf32, #tpu.memory_space<vmem>>, vector<2x8x1xf32>,
      %cst_41 = arith.constant 0.000000e+00 : f32
      %38 = vector.broadcast %cst_41 : f32 to vector<2x8x128xf32>
      %c0_42 = arith.constant 0 : index
      %c0_43 = arith.constant 0 : index
      %c0_44 = arith.constant 0 : index
      %39 = vector.load %arg9[%c0_42, %c0_43, %c0_44] : memref<2x8x128xf32, #tpu.memory_space<vmem>>, vector<2x8x128xf32>
      tpu.vector_store %arg9[%c0_42, %c0_43, %c0_44], %38 {strides = array<i32>} : memref<2x8x128xf32, #tpu.memory_space<vmem>>, vector<2x8x128xf32>,
    } else {
    }
    %c0 = arith.constant 0 : index
    %c0_1 = arith.constant 0 : index
    %c0_2 = arith.constant 0 : index
    %3 = vector.load %arg3[%c0, %c0_1, %c0_2] : memref<2x8x128xf32, #tpu.memory_space<vmem>>, vector<2x8x128xf32>
    %cst = arith.constant 0.176776692 : f32
    %4 = vector.broadcast %cst : f32 to vector<2x8x128xf32>
    %5 = arith.mulf %3, %4 : vector<2x8x128xf32>
    %c0_3 = arith.constant 0 : index
    %c0_4 = arith.constant 0 : index
    %c0_5 = arith.constant 0 : index
    %6 = vector.load %arg4[%c0_3, %c0_4, %c0_5] : memref<2x8x128xf32, #tpu.memory_space<vmem>>, vector<2x8x128xf32>
    "tpu.trace_start"() <{level = 10 : i32, message = "bqd,bkd->bqk"}> : () -> ()
    %cst_6 = arith.constant dense<0.000000e+00> : vector<2x8x8xf32>
    %7 = tpu.matmul %5, %6, %cst_6 {dimension_numbers = #tpu.dot_dimension_numbers<[2], [2], [1], [1], [0, 0, 0, 1, 1, 1], [0], [0]>} : vector<2x8x128xf32>, vector<2x8x128xf32>, vector<2x8x8xf32> -> vector<2x8x8xf32>
    "tpu.trace_stop"() : () -> ()
    %c0_7 = arith.constant 0 : index
    %c0_8 = arith.constant 0 : index
    %c0_9 = arith.constant 0 : index
    %8 = vector.load %arg7[%c0_7, %c0_8, %c0_9] : memref<2x8x1xf32, #tpu.memory_space<vmem>>, vector<2x8x1xf32>
    %cst_10 = arith.constant dense<0xFF800000> : vector<2x8xf32>
    %9 = vector.multi_reduction <maximumf>, %7, %cst_10 [2] : vector<2x8x8xf32> to vector<2x8xf32>
    %10 = vector.shape_cast %9 : vector<2x8xf32> to vector<2x8x1xf32>
    %11 = arith.maximumf %8, %10 : vector<2x8x1xf32>
    %12 = arith.subf %8, %11 : vector<2x8x1xf32>
    %13 = math.exp %12 : vector<2x8x1xf32>
    %14 = vector.broadcast %11 : vector<2x8x1xf32> to vector<2x8x8xf32>
    %15 = arith.subf %7, %14 : vector<2x8x8xf32>
    %16 = math.exp %15 : vector<2x8x8xf32>
    %c0_11 = arith.constant 0 : index
    %c0_12 = arith.constant 0 : index
    %c0_13 = arith.constant 0 : index
    %17 = vector.load %arg8[%c0_11, %c0_12, %c0_13] : memref<2x8x1xf32, #tpu.memory_space<vmem>>, vector<2x8x1xf32>
    %18 = arith.mulf %13, %17 : vector<2x8x1xf32>
    %cst_14 = arith.constant dense<0.000000e+00> : vector<2x8xf32>
    %19 = vector.multi_reduction <add>, %16, %cst_14 [2] : vector<2x8x8xf32> to vector<2x8xf32>
    %20 = vector.shape_cast %19 : vector<2x8xf32> to vector<2x8x1xf32>
    %21 = arith.addf %18, %20 : vector<2x8x1xf32>
    %c0_15 = arith.constant 0 : index
    %c0_16 = arith.constant 0 : index
    %c0_17 = arith.constant 0 : index
    %22 = vector.load %arg8[%c0_15, %c0_16, %c0_17] : memref<2x8x1xf32, #tpu.memory_space<vmem>>, vector<2x8x1xf32>
    tpu.vector_store %arg8[%c0_15, %c0_16, %c0_17], %21 {strides = array<i32>} : memref<2x8x1xf32, #tpu.memory_space<vmem>>, vector<2x8x1xf32>,
    %c0_18 = arith.constant 0 : index
    %c0_19 = arith.constant 0 : index
    %c0_20 = arith.constant 0 : index
    %23 = vector.load %arg9[%c0_18, %c0_19, %c0_20] : memref<2x8x128xf32, #tpu.memory_space<vmem>>, vector<2x8x128xf32>
    %24 = vector.broadcast %13 : vector<2x8x1xf32> to vector<2x8x128xf32>
    %25 = arith.mulf %24, %23 : vector<2x8x128xf32>
    %c0_21 = arith.constant 0 : index
    %c0_22 = arith.constant 0 : index
    %c0_23 = arith.constant 0 : index
    %26 = vector.load %arg5[%c0_21, %c0_22, %c0_23] : memref<2x8x128xf32, #tpu.memory_space<vmem>>, vector<2x8x128xf32>
    "tpu.trace_start"() <{level = 10 : i32, message = "bqk,bkd->bqd"}> : () -> ()
    %cst_24 = arith.constant dense<0.000000e+00> : vector<2x8x128xf32>
    %27 = tpu.matmul %16, %26, %cst_24 {dimension_numbers = #tpu.dot_dimension_numbers<[2], [1], [1], [2], [0, 0, 0, 1, 1, 2], [0], [0]>} : vector<2x8x8xf32>, vector<2x8x128xf32>, vector<2x8x128xf32> -> vector<2x8x128xf32>
    "tpu.trace_stop"() : () -> ()
    %28 = arith.addf %25, %27 : vector<2x8x128xf32>
    %c0_25 = arith.constant 0 : index
    %c0_26 = arith.constant 0 : index
    %c0_27 = arith.constant 0 : index
    %29 = vector.load %arg9[%c0_25, %c0_26, %c0_27] : memref<2x8x128xf32, #tpu.memory_space<vmem>>, vector<2x8x128xf32>
    tpu.vector_store %arg9[%c0_25, %c0_26, %c0_27], %28 {strides = array<i32>} : memref<2x8x128xf32, #tpu.memory_space<vmem>>, vector<2x8x128xf32>,
    %c0_28 = arith.constant 0 : index
    %c0_29 = arith.constant 0 : index
    %c0_30 = arith.constant 0 : index
    %30 = vector.load %arg7[%c0_28, %c0_29, %c0_30] : memref<2x8x1xf32, #tpu.memory_space<vmem>>, vector<2x8x1xf32>
    tpu.vector_store %arg7[%c0_28, %c0_29, %c0_30], %11 {strides = array<i32>} : memref<2x8x1xf32, #tpu.memory_space<vmem>>, vector<2x8x1xf32>,
    %c0_i32_31 = arith.constant 0 : i32
    %31 = arith.cmpi eq, %arg2, %c0_i32_31 : i32
    %32 = arith.extui %31 : i1 to i32
    %c0_i32_32 = arith.constant 0 : i32
    %33 = arith.cmpi ne, %32, %c0_i32_32 : i32
    scf.if %33 {
      %c0_33 = arith.constant 0 : index
      %c0_34 = arith.constant 0 : index
      %c0_35 = arith.constant 0 : index
      %34 = vector.load %arg8[%c0_33, %c0_34, %c0_35] : memref<2x8x1xf32, #tpu.memory_space<vmem>>, vector<2x8x1xf32>
      %35 = tpu.reciprocal %34 {approx = true} : vector<2x8x1xf32> -> vector<2x8x1xf32>
      %c0_36 = arith.constant 0 : index
      %c0_37 = arith.constant 0 : index
      %c0_38 = arith.constant 0 : index
      %36 = vector.load %arg9[%c0_36, %c0_37, %c0_38] : memref<2x8x128xf32, #tpu.memory_space<vmem>>, vector<2x8x128xf32>
      %37 = vector.broadcast %35 : vector<2x8x1xf32> to vector<2x8x128xf32>
      %38 = arith.mulf %36, %37 : vector<2x8x128xf32>
      %c0_39 = arith.constant 0 : index
      %c0_40 = arith.constant 0 : index
      %c0_41 = arith.constant 0 : index
      %39 = vector.load %arg6[%c0_39, %c0_40, %c0_41] : memref<2x8x128xf32, #tpu.memory_space<vmem>>, vector<2x8x128xf32>
      tpu.vector_store %arg6[%c0_39, %c0_40, %c0_41], %38 {strides = array<i32>} : memref<2x8x128xf32, #tpu.memory_space<vmem>>, vector<2x8x128xf32>,
    } else {
    }
    return
  }
  func.func @transform_0(%arg0: i32, %arg1: i32, %arg2: i32) -> (i32, i32, i32) {
    %c0_i32 = arith.constant 0 : i32
    %c0_i32_0 = arith.constant 0 : i32
    return %arg0, %arg1, %c0_i32 : i32, i32, i32
  }
  func.func @transform_1(%arg0: i32, %arg1: i32, %arg2: i32) -> (i32, i32, i32) {
    %c0_i32 = arith.constant 0 : i32
    %c0_i32_0 = arith.constant 0 : i32
    return %arg0, %arg2, %c0_i32 : i32, i32, i32
  }
  func.func @transform_2(%arg0: i32, %arg1: i32, %arg2: i32) -> (i32, i32, i32) {
    %c0_i32 = arith.constant 0 : i32
    %c0_i32_0 = arith.constant 0 : i32
    return %arg0, %arg2, %c0_i32 : i32, i32, i32
  }
  func.func @transform_3(%arg0: i32, %arg1: i32, %arg2: i32) -> (i32, i32, i32) {
    %c0_i32 = arith.constant 0 : i32
    %c0_i32_0 = arith.constant 0 : i32
    return %arg0, %arg1, %c0_i32 : i32, i32, i32
  }
}

</mosaic_0001>

<llo_original>
// kernel: tpu_custom_call.1
$region0: #{tpu_custom_call.1}
  #allocation0 [shape = 'u32[]', space=smem, size = 0x4, offset = 0x4, fixed_abs, tag = 'smem constant byte address 0x4 - core index']
  #allocation1 [shape = 'u32[144,128]{1,0:T(1,128)}', space=vmem, size = 0x12000, scoped, tag = 'internal scratch']
  #allocation2 [shape = 'f32[2,8,1]{2,1,0:T(8,128)}', space=vmem, size = 0x2000, scoped, tag = 'scratch operand']
  #allocation3 [shape = 'f32[2,8,1]{2,1,0:T(8,128)}', space=vmem, size = 0x2000, scoped, tag = 'scratch operand']
  #allocation4 [shape = 'f32[2,8,128]{2,1,0:T(8,128)}', space=vmem, size = 0x2000, scoped, tag = 'scratch operand']
  %s0 = inlined_call_operand.hbm [shape: f32[2,8,128], index: 0, kind: input, shape index: {}]
  %s1 = inlined_call_operand.hbm [shape: f32[2,8,128], index: 1, kind: input, shape index: {}]
  %s2 = inlined_call_operand.hbm [shape: f32[2,8,128], index: 2, kind: input, shape index: {}]
  %s3 = inlined_call_operand.hbm [shape: f32[2,8,128], index: 3, kind: output, shape index: {}]
  %s4 = sld [smem:[#allocation0]]
  $region42: #{tpu_custom_call.1} parent=0
    _
  %s6 = ssub.s32 1, %s4
  %s7 = scalar_select 0, %s6, %s4
  $region1: #{tpu_custom_call.1} parent=0
    #allocation5 [shape = 'u8[8192]{0}', space=vmem, size = 0x2000, scoped, tag = 'input window, operand 0, single buffered']
    #allocation6 [shape = 's32[1]{0}', space=sflag, size = 0x4, scoped, tag = 'scoped memory for tpu_custom_call.1']
    #allocation7 [shape = 's32[1]{0}', space=sflag, size = 0x4, scoped, tag = 'scoped memory for tpu_custom_call.1']
    #allocation8 [shape = 'u8[8192]{0}', space=vmem, size = 0x2000, scoped, tag = 'input window, operand 1, single buffered']
    #allocation9 [shape = 's32[1]{0}', space=sflag, size = 0x4, scoped, tag = 'scoped memory for tpu_custom_call.1']
    #allocation10 [shape = 'u8[8192]{0}', space=vmem, size = 0x2000, scoped, tag = 'input window, operand 2, single buffered']
    #allocation11 [shape = 'u8[8192]{0}', space=vmem, size = 0x2000, scoped, tag = 'output window, operand 0, single buffered']
    %8 = vsyncpa [#allocation6], 0
    %9 = vsyncpa [#allocation9], 0
    %10 = vsyncpa [#allocation7], 0
    // Predicated region
    $region2: #{tpu_custom_call.1} parent=1 // pred_check
      _
    $region3: #{tpu_custom_call.1} parent=1 // pred_check_branch
      %12 = sbr.rel (0) target = $region5
    $region4: #{tpu_custom_call.1} parent=1 // pred_region
      %s14 = ssub.s32 256, 256
      %15 = vsyncadd [#allocation6], %s14
      %s16 = sshll.u32 [#allocation5], 4
      %s17 = int_to_ptr.vmem [resolvable:$true] %s16
      %22 = dma.hbm_to_vmem [thread:$0]  %s0, 256, %s17, [#allocation6], 128, 128, 8
    $region5: #{tpu_custom_call.1} parent=1 // pred_fallthru
      _
    // Predicated region
    $region6: #{tpu_custom_call.1} parent=1 // pred_check
      _
    $region7: #{tpu_custom_call.1} parent=1 // pred_check_branch
      %24 = sbr.rel (0) target = $region9
    $region8: #{tpu_custom_call.1} parent=1 // pred_region
      %s26 = ssub.s32 256, 256
      %27 = vsyncadd [#allocation9], %s26
      %s28 = sshll.u32 [#allocation8], 4
      %s29 = int_to_ptr.vmem [resolvable:$true] %s28
      %34 = dma.hbm_to_vmem [thread:$0]  %s1, 256, %s29, [#allocation9], 128, 128, 8
    $region9: #{tpu_custom_call.1} parent=1 // pred_fallthru
      _
    // Predicated region
    $region10: #{tpu_custom_call.1} parent=1 // pred_check
      _
    $region11: #{tpu_custom_call.1} parent=1 // pred_check_branch
      %36 = sbr.rel (0) target = $region13
    $region12: #{tpu_custom_call.1} parent=1 // pred_region
      %s38 = ssub.s32 256, 256
      %39 = vsyncadd [#allocation9], %s38
      %s40 = sshll.u32 [#allocation10], 4
      %s41 = int_to_ptr.vmem [resolvable:$true] %s40
      %46 = dma.hbm_to_vmem [thread:$0]  %s2, 256, %s41, [#allocation9], 128, 128, 8
    $region13: #{tpu_custom_call.1} parent=1 // pred_fallthru
      _
    // Predicated region
    $region14: #{tpu_custom_call.1} parent=1 // pred_check
      _
    $region15: #{tpu_custom_call.1} parent=1 // pred_check_branch
      %48 = sbr.rel (0) target = $region17
    $region16: #{tpu_custom_call.1} parent=1 // pred_region
      %49 = dma.done [#allocation6], 256
    $region17: #{tpu_custom_call.1} parent=1 // pred_fallthru
      _
    // Predicated region
    $region18: #{tpu_custom_call.1} parent=1 // pred_check
      _
    $region19: #{tpu_custom_call.1} parent=1 // pred_check_branch
      %51 = sbr.rel (0) target = $region21
    $region20: #{tpu_custom_call.1} parent=1 // pred_region
      %52 = dma.done [#allocation9], 256
    $region21: #{tpu_custom_call.1} parent=1 // pred_fallthru
      _
    // Predicated region
    $region22: #{tpu_custom_call.1} parent=1 // pred_check
      _
    $region23: #{tpu_custom_call.1} parent=1 // pred_check_branch
      %54 = sbr.rel (0) target = $region25
    $region24: #{tpu_custom_call.1} parent=1 // pred_region
      %55 = dma.done [#allocation9], 256
    $region25: #{tpu_custom_call.1} parent=1 // pred_fallthru
      _
    %p56 = scmp.eq.s32.totalorder 0, 0
    // Predicated region
    $region26: #{tpu_custom_call.1} parent=1 // pred_check
      %p57 = pneg %p56
    $region27: #{tpu_custom_call.1} parent=1 // pred_check_branch
      %59 = sbr.rel (%p57) target = $region29
    $region28: #{tpu_custom_call.1} parent=1 // pred_region
      %vm60 = vcmask 7168
      %61 = vst.msk [vmem:[#allocation2] sm:$0xff] %vm60, -inf
      %62 = vst.msk [vmem:[#allocation2 + $0x8] sm:$0xff] %vm60, -inf
      %63 = vst.msk [vmem:[#allocation3] sm:$0xff] %vm60, 0.0
      %64 = vst.msk [vmem:[#allocation3 + $0x8] sm:$0xff] %vm60, 0.0
      %65 = vst [vmem:[#allocation4] sm:$0xff] 0.0
      %66 = vst [vmem:[#allocation4 + $0x8] sm:$0xff] 0.0
    $region29: #{tpu_custom_call.1} parent=1 // pred_fallthru
      _
    %v67 = vld [vmem:[#allocation5] sm:$0xff]
    %v68 = vld [vmem:[#allocation5 + $0x8] sm:$0xff]
    %v69 = vmul.f32 %v67, 0.17677669
    %v70 = vmul.f32 %v68, 0.17677669
    %v71 = vld [vmem:[#allocation8] sm:$0xff]
    %v72 = vld [vmem:[#allocation8 + $0x8] sm:$0xff]
    %73 = vmatprep.subr.mxu0 0.0
    %74 = vmatpush1.xpose.msra.mxu0 %v71
    %75 = vmatprep.subr.mxu0 0.0
    %76 = vmatpush1.xpose.msra.mxu0 0.0
    %77 = vmatprep.subr.mxu0 0.0
    %78 = vmatpush1.xpose.msra.mxu0 0.0
    %79 = vmatprep.subr.mxu0 0.0
    %80 = vmatpush1.xpose.msra.mxu0 0.0
    %81 = vmatprep.subr.mxu0 0.0
    %82 = vmatpush1.xpose.msra.mxu0 0.0
    %83 = vmatprep.subr.mxu0 0.0
    %84 = vmatpush1.xpose.msra.mxu0 0.0
    %85 = vmatprep.subr.mxu0 0.0
    %86 = vmatpush1.xpose.msra.mxu0 0.0
    %87 = vmatprep.subr.mxu0 0.0
    %88 = vmatpush1.xpose.msra.mxu0 0.0
    %89 = vmatprep.subr.mxu0 0.0
    %90 = vmatpush1.xpose.msra.mxu0 0.0
    %91 = vmatprep.subr.mxu0 0.0
    %92 = vmatpush1.xpose.msra.mxu0 0.0
    %93 = vmatprep.subr.mxu0 0.0
    %94 = vmatpush1.xpose.msra.mxu0 0.0
    %95 = vmatprep.subr.mxu0 0.0
    %96 = vmatpush1.xpose.msra.mxu0 0.0
    %97 = vmatprep.subr.mxu0 0.0
    %98 = vmatpush1.xpose.msra.mxu0 0.0
    %99 = vmatprep.subr.mxu0 0.0
    %100 = vmatpush1.xpose.msra.mxu0 0.0
    %101 = vmatprep.subr.mxu0 0.0
    %102 = vmatpush1.xpose.msra.mxu0 0.0
    %103 = vmatprep.subr.mxu0 0.0
    %104 = vmatpush1.xpose.msra.mxu0 0.0
    %105 = vmatprep.subr.mxu0 0.0
    %106 = vmatpush1.xpose.msra.mxu0 0.0
    %107 = vmatprep.subr.mxu0 0.0
    %108 = vmatpush1.xpose.msra.mxu0 0.0
    %109 = vmatprep.subr.mxu0 0.0
    %110 = vmatpush1.xpose.msra.mxu0 0.0
    %111 = vmatprep.subr.mxu0 0.0
    %112 = vmatpush1.xpose.msra.mxu0 0.0
    %113 = vmatprep.subr.mxu0 0.0
    %114 = vmatpush1.xpose.msra.mxu0 0.0
    %115 = vmatprep.subr.mxu0 0.0
    %116 = vmatpush1.xpose.msra.mxu0 0.0
    %117 = vmatprep.subr.mxu0 0.0
    %118 = vmatpush1.xpose.msra.mxu0 0.0
    %119 = vmatprep.subr.mxu0 0.0
    %120 = vmatpush1.xpose.msra.mxu0 0.0
    %121 = vmatprep.subr.mxu0 0.0
    %122 = vmatpush1.xpose.msra.mxu0 0.0
    %123 = vmatprep.subr.mxu0 0.0
    %124 = vmatpush1.xpose.msra.mxu0 0.0
    %125 = vmatprep.subr.mxu0 0.0
    %126 = vmatpush1.xpose.msra.mxu0 0.0
    %127 = vmatprep.subr.mxu0 0.0
    %128 = vmatpush1.xpose.msra.mxu0 0.0
    %129 = vmatprep.subr.mxu0 0.0
    %130 = vmatpush1.xpose.msra.mxu0 0.0
    %131 = vmatprep.subr.mxu0 0.0
    %132 = vmatpush1.xpose.msra.mxu0 0.0
    %133 = vmatprep.subr.mxu0 0.0
    %134 = vmatpush1.xpose.msra.mxu0 0.0
    %135 = vmatprep.subr.mxu0 0.0
    %136 = vmatpush1.xpose.msra.mxu0 0.0
    %137 = vmatprep.mubr.f32.mxu0 0.0
    %138 = vmatmul.mubr.f32.gmra.mrb[0].mxu0 %v69
    %v139 = vpop.f32.mrb[0].mxu0
    %v140 = vadd.f32 0.0, %v139
    %v141 = vpop.f32.mrb[0].mxu0
    %142 = vdwg.mxu0
    %143 = vmatprep.subr.mxu0 0.0
    %144 = vmatpush1.xpose.msra.mxu0 %v72
    %145 = vmatprep.subr.mxu0 0.0
    %146 = vmatpush1.xpose.msra.mxu0 0.0
    %147 = vmatprep.subr.mxu0 0.0
    %148 = vmatpush1.xpose.msra.mxu0 0.0
    %149 = vmatprep.subr.mxu0 0.0
    %150 = vmatpush1.xpose.msra.mxu0 0.0
    %151 = vmatprep.subr.mxu0 0.0
    %152 = vmatpush1.xpose.msra.mxu0 0.0
    %153 = vmatprep.subr.mxu0 0.0
    %154 = vmatpush1.xpose.msra.mxu0 0.0
    %155 = vmatprep.subr.mxu0 0.0
    %156 = vmatpush1.xpose.msra.mxu0 0.0
    %157 = vmatprep.subr.mxu0 0.0
    %158 = vmatpush1.xpose.msra.mxu0 0.0
    %159 = vmatprep.subr.mxu0 0.0
    %160 = vmatpush1.xpose.msra.mxu0 0.0
    %161 = vmatprep.subr.mxu0 0.0
    %162 = vmatpush1.xpose.msra.mxu0 0.0
    %163 = vmatprep.subr.mxu0 0.0
    %164 = vmatpush1.xpose.msra.mxu0 0.0
    %165 = vmatprep.subr.mxu0 0.0
    %166 = vmatpush1.xpose.msra.mxu0 0.0
    %167 = vmatprep.subr.mxu0 0.0
    %168 = vmatpush1.xpose.msra.mxu0 0.0
    %169 = vmatprep.subr.mxu0 0.0
    %170 = vmatpush1.xpose.msra.mxu0 0.0
    %171 = vmatprep.subr.mxu0 0.0
    %172 = vmatpush1.xpose.msra.mxu0 0.0
    %173 = vmatprep.subr.mxu0 0.0
    %174 = vmatpush1.xpose.msra.mxu0 0.0
    %175 = vmatprep.subr.mxu0 0.0
    %176 = vmatpush1.xpose.msra.mxu0 0.0
    %177 = vmatprep.subr.mxu0 0.0
    %178 = vmatpush1.xpose.msra.mxu0 0.0
    %179 = vmatprep.subr.mxu0 0.0
    %180 = vmatpush1.xpose.msra.mxu0 0.0
    %181 = vmatprep.subr.mxu0 0.0
    %182 = vmatpush1.xpose.msra.mxu0 0.0
    %183 = vmatprep.subr.mxu0 0.0
    %184 = vmatpush1.xpose.msra.mxu0 0.0
    %185 = vmatprep.subr.mxu0 0.0
    %186 = vmatpush1.xpose.msra.mxu0 0.0
    %187 = vmatprep.subr.mxu0 0.0
    %188 = vmatpush1.xpose.msra.mxu0 0.0
    %189 = vmatprep.subr.mxu0 0.0
    %190 = vmatpush1.xpose.msra.mxu0 0.0
    %191 = vmatprep.subr.mxu0 0.0
    %192 = vmatpush1.xpose.msra.mxu0 0.0
    %193 = vmatprep.subr.mxu0 0.0
    %194 = vmatpush1.xpose.msra.mxu0 0.0
    %195 = vmatprep.subr.mxu0 0.0
    %196 = vmatpush1.xpose.msra.mxu0 0.0
    %197 = vmatprep.subr.mxu0 0.0
    %198 = vmatpush1.xpose.msra.mxu0 0.0
    %199 = vmatprep.subr.mxu0 0.0
    %200 = vmatpush1.xpose.msra.mxu0 0.0
    %201 = vmatprep.subr.mxu0 0.0
    %202 = vmatpush1.xpose.msra.mxu0 0.0
    %203 = vmatprep.subr.mxu0 0.0
    %204 = vmatpush1.xpose.msra.mxu0 0.0
    %205 = vmatprep.subr.mxu0 0.0
    %206 = vmatpush1.xpose.msra.mxu0 0.0
    %207 = vmatprep.mubr.f32.mxu0 0.0
    %208 = vmatmul.mubr.f32.gmra.mrb[0].mxu0 %v70
    %v209 = vpop.f32.mrb[0].mxu0
    %v210 = vadd.f32 0.0, %v209
    %v211 = vpop.f32.mrb[0].mxu0
    %212 = vdwg.mxu0
    %v213 = vld [vmem:[#allocation2] sm:$0xff]
    %v214 = vld [vmem:[#allocation2 + $0x8] sm:$0xff]
    %vm215 = vcmask 64512
    %v216 = vsel %vm215, %v140, -inf
    %217 = vmax.xlane.f32.xlu0 %v216
    %v218 = vpop.xlane.xlu0 %217
    %v219 = vsel %vm215, %v210, -inf
    %220 = vmax.xlane.f32.xlu0 %v219
    %v221 = vpop.xlane.xlu0 %220
    %v222 = vmax.f32 %v213, %v218
    %v223 = vmax.f32 %v214, %v221
    %v224 = vsub.f32 %v213, %v222
    %v225 = vsub.f32 %v214, %v223
    %v226 = vmul.f32 %v224, 1.442695
    %v227 = vpow.pop %v226
    %v228 = vmul.f32 %v225, 1.442695
    %v229 = vpow.pop %v228
    %231 = vset.pattern.permute.xlu0 0
    %232 = vperm.xlu0 %231, %v222
    %v233 = vpop.permute.xlu0 %232
    %236 = vset.pattern.permute.xlu0 0
    %237 = vperm.xlu0 %236, %v223
    %v238 = vpop.permute.xlu0 %237
    %v240 = vsub.f32 %v140, %v233
    %v241 = vsub.f32 %v210, %v238
    %v242 = vmul.f32 %v240, 1.442695
    %v243 = vpow.pop %v242
    %v244 = vmul.f32 %v241, 1.442695
    %v245 = vpow.pop %v244
    %v246 = vld [vmem:[#allocation3] sm:$0xff]
    %v247 = vld [vmem:[#allocation3 + $0x8] sm:$0xff]
    %v248 = vmul.f32 %v227, %v246
    %v249 = vmul.f32 %v229, %v247
    %v250 = vsel %vm215, %v243, 0.0
    %251 = vadd.xlane.f32.xlu0 %v250
    %v252 = vpop.xlane.xlu0 %251
    %v253 = vsel %vm215, %v245, 0.0
    %254 = vadd.xlane.f32.xlu0 %v253
    %v255 = vpop.xlane.xlu0 %254
    %v256 = vadd.f32 %v248, %v252
    %v257 = vadd.f32 %v249, %v255
    %vm258 = vcmask 7168
    %259 = vst.msk [vmem:[#allocation3] sm:$0xff] %vm258, %v256
    %260 = vst.msk [vmem:[#allocation3 + $0x8] sm:$0xff] %vm258, %v257
    %v261 = vld [vmem:[#allocation4] sm:$0xff]
    %v262 = vld [vmem:[#allocation4 + $0x8] sm:$0xff]
    %264 = vset.pattern.permute.xlu0 0
    %265 = vperm.xlu0 %264, %v227
    %v266 = vpop.permute.xlu0 %265
    %269 = vset.pattern.permute.xlu0 0
    %270 = vperm.xlu0 %269, %v229
    %v271 = vpop.permute.xlu0 %270
    %v273 = vmul.f32 %v266, %v261
    %v274 = vmul.f32 %v271, %v262
    %v275 = vld [vmem:[#allocation10] sm:$0xff]
    %v276 = vld [vmem:[#allocation10 + $0x8] sm:$0xff]
    %v278 = vsel %vm215, %v243, 0
    %280 = vmatprep.subr.mxu0 0.0
    %281 = vmatpush1.msra.mxu0 %v275
    %282 = vmatprep.subr.mxu0 0.0
    %283 = vmatpush1.msra.mxu0 0.0
    %284 = vmatprep.subr.mxu0 0.0
    %285 = vmatpush1.msra.mxu0 0.0
    %286 = vmatprep.subr.mxu0 0.0
    %287 = vmatpush1.msra.mxu0 0.0
    %288 = vmatprep.subr.mxu0 0.0
    %289 = vmatpush1.msra.mxu0 0.0
    %290 = vmatprep.subr.mxu0 0.0
    %291 = vmatpush1.msra.mxu0 0.0
    %292 = vmatprep.subr.mxu0 0.0
    %293 = vmatpush1.msra.mxu0 0.0
    %294 = vmatprep.subr.mxu0 0.0
    %295 = vmatpush1.msra.mxu0 0.0
    %296 = vmatprep.subr.mxu0 0.0
    %297 = vmatpush1.msra.mxu0 0.0
    %298 = vmatprep.subr.mxu0 0.0
    %299 = vmatpush1.msra.mxu0 0.0
    %300 = vmatprep.subr.mxu0 0.0
    %301 = vmatpush1.msra.mxu0 0.0
    %302 = vmatprep.subr.mxu0 0.0
    %303 = vmatpush1.msra.mxu0 0.0
    %304 = vmatprep.subr.mxu0 0.0
    %305 = vmatpush1.msra.mxu0 0.0
    %306 = vmatprep.subr.mxu0 0.0
    %307 = vmatpush1.msra.mxu0 0.0
    %308 = vmatprep.subr.mxu0 0.0
    %309 = vmatpush1.msra.mxu0 0.0
    %310 = vmatprep.subr.mxu0 0.0
    %311 = vmatpush1.msra.mxu0 0.0
    %312 = vmatprep.subr.mxu0 0.0
    %313 = vmatpush1.msra.mxu0 0.0
    %314 = vmatprep.subr.mxu0 0.0
    %315 = vmatpush1.msra.mxu0 0.0
    %316 = vmatprep.subr.mxu0 0.0
    %317 = vmatpush1.msra.mxu0 0.0
    %318 = vmatprep.subr.mxu0 0.0
    %319 = vmatpush1.msra.mxu0 0.0
    %320 = vmatprep.subr.mxu0 0.0
    %321 = vmatpush1.msra.mxu0 0.0
    %322 = vmatprep.subr.mxu0 0.0
    %323 = vmatpush1.msra.mxu0 0.0
    %324 = vmatprep.subr.mxu0 0.0
    %325 = vmatpush1.msra.mxu0 0.0
    %326 = vmatprep.subr.mxu0 0.0
    %327 = vmatpush1.msra.mxu0 0.0
    %328 = vmatprep.subr.mxu0 0.0
    %329 = vmatpush1.msra.mxu0 0.0
    %330 = vmatprep.subr.mxu0 0.0
    %331 = vmatpush1.msra.mxu0 0.0
    %332 = vmatprep.subr.mxu0 0.0
    %333 = vmatpush1.msra.mxu0 0.0
    %334 = vmatprep.subr.mxu0 0.0
    %335 = vmatpush1.msra.mxu0 0.0
    %336 = vmatprep.subr.mxu0 0.0
    %337 = vmatpush1.msra.mxu0 0.0
    %338 = vmatprep.subr.mxu0 0.0
    %339 = vmatpush1.msra.mxu0 0.0
    %340 = vmatprep.subr.mxu0 0.0
    %341 = vmatpush1.msra.mxu0 0.0
    %342 = vmatprep.subr.mxu0 0.0
    %343 = vmatpush1.msra.mxu0 0.0
    %344 = vmatprep.mubr.f32.mxu0 0.0
    %345 = vmatmul.mubr.f32.gmra.mrb[0].mxu0 %v278
    %v346 = vpop.f32.mrb[0].mxu0
    %v347 = vadd.f32 0.0, %v346
    %v348 = vpop.f32.mrb[0].mxu0
    %349 = vdwg.mxu0
    %v351 = vsel %vm215, %v245, 0
    %353 = vmatprep.subr.mxu0 0.0
    %354 = vmatpush1.msra.mxu0 %v276
    %355 = vmatprep.subr.mxu0 0.0
    %356 = vmatpush1.msra.mxu0 0.0
    %357 = vmatprep.subr.mxu0 0.0
    %358 = vmatpush1.msra.mxu0 0.0
    %359 = vmatprep.subr.mxu0 0.0
    %360 = vmatpush1.msra.mxu0 0.0
    %361 = vmatprep.subr.mxu0 0.0
    %362 = vmatpush1.msra.mxu0 0.0
    %363 = vmatprep.subr.mxu0 0.0
    %364 = vmatpush1.msra.mxu0 0.0
    %365 = vmatprep.subr.mxu0 0.0
    %366 = vmatpush1.msra.mxu0 0.0
    %367 = vmatprep.subr.mxu0 0.0
    %368 = vmatpush1.msra.mxu0 0.0
    %369 = vmatprep.subr.mxu0 0.0
    %370 = vmatpush1.msra.mxu0 0.0
    %371 = vmatprep.subr.mxu0 0.0
    %372 = vmatpush1.msra.mxu0 0.0
    %373 = vmatprep.subr.mxu0 0.0
    %374 = vmatpush1.msra.mxu0 0.0
    %375 = vmatprep.subr.mxu0 0.0
    %376 = vmatpush1.msra.mxu0 0.0
    %377 = vmatprep.subr.mxu0 0.0
    %378 = vmatpush1.msra.mxu0 0.0
    %379 = vmatprep.subr.mxu0 0.0
    %380 = vmatpush1.msra.mxu0 0.0
    %381 = vmatprep.subr.mxu0 0.0
    %382 = vmatpush1.msra.mxu0 0.0
    %383 = vmatprep.subr.mxu0 0.0
    %384 = vmatpush1.msra.mxu0 0.0
    %385 = vmatprep.subr.mxu0 0.0
    %386 = vmatpush1.msra.mxu0 0.0
    %387 = vmatprep.subr.mxu0 0.0
    %388 = vmatpush1.msra.mxu0 0.0
    %389 = vmatprep.subr.mxu0 0.0
    %390 = vmatpush1.msra.mxu0 0.0
    %391 = vmatprep.subr.mxu0 0.0
    %392 = vmatpush1.msra.mxu0 0.0
    %393 = vmatprep.subr.mxu0 0.0
    %394 = vmatpush1.msra.mxu0 0.0
    %395 = vmatprep.subr.mxu0 0.0
    %396 = vmatpush1.msra.mxu0 0.0
    %397 = vmatprep.subr.mxu0 0.0
    %398 = vmatpush1.msra.mxu0 0.0
    %399 = vmatprep.subr.mxu0 0.0
    %400 = vmatpush1.msra.mxu0 0.0
    %401 = vmatprep.subr.mxu0 0.0
    %402 = vmatpush1.msra.mxu0 0.0
    %403 = vmatprep.subr.mxu0 0.0
    %404 = vmatpush1.msra.mxu0 0.0
    %405 = vmatprep.subr.mxu0 0.0
    %406 = vmatpush1.msra.mxu0 0.0
    %407 = vmatprep.subr.mxu0 0.0
    %408 = vmatpush1.msra.mxu0 0.0
    %409 = vmatprep.subr.mxu0 0.0
    %410 = vmatpush1.msra.mxu0 0.0
    %411 = vmatprep.subr.mxu0 0.0
    %412 = vmatpush1.msra.mxu0 0.0
    %413 = vmatprep.subr.mxu0 0.0
    %414 = vmatpush1.msra.mxu0 0.0
    %415 = vmatprep.subr.mxu0 0.0
    %416 = vmatpush1.msra.mxu0 0.0
    %417 = vmatprep.mubr.f32.mxu0 0.0
    %418 = vmatmul.mubr.f32.gmra.mrb[0].mxu0 %v351
    %v419 = vpop.f32.mrb[0].mxu0
    %v420 = vadd.f32 0.0, %v419
    %v421 = vpop.f32.mrb[0].mxu0
    %422 = vdwg.mxu0
    %v423 = vadd.f32 %v273, %v347
    %v424 = vadd.f32 %v274, %v420
    %425 = vst [vmem:[#allocation4] sm:$0xff] %v423
    %426 = vst [vmem:[#allocation4 + $0x8] sm:$0xff] %v424
    %427 = vst.msk [vmem:[#allocation2] sm:$0xff] %vm258, %v222
    %428 = vst.msk [vmem:[#allocation2 + $0x8] sm:$0xff] %vm258, %v223
    // Predicated region
    $region30: #{tpu_custom_call.1} parent=1 // pred_check
      %p429 = pneg %p56
    $region31: #{tpu_custom_call.1} parent=1 // pred_check_branch
      %431 = sbr.rel (%p429) target = $region33
    $region32: #{tpu_custom_call.1} parent=1 // pred_region
      %v432 = vld [vmem:[#allocation3] sm:$0xff]
      %v433 = vld [vmem:[#allocation3 + $0x8] sm:$0xff]
      %v434 = vrcp.pop %v432
      %v435 = vrcp.pop %v433
      %v436 = vld [vmem:[#allocation4] sm:$0xff]
      %v437 = vld [vmem:[#allocation4 + $0x8] sm:$0xff]
      %439 = vset.pattern.permute.xlu0 0
      %440 = vperm.xlu0 %439, %v434
      %v441 = vpop.permute.xlu0 %440
      %444 = vset.pattern.permute.xlu0 0
      %445 = vperm.xlu0 %444, %v435
      %v446 = vpop.permute.xlu0 %445
      %v448 = vmul.f32 %v436, %v441
      %v449 = vmul.f32 %v437, %v446
      %450 = vst [vmem:[#allocation11] sm:$0xff] %v448
      %451 = vst [vmem:[#allocation11 + $0x8] sm:$0xff] %v449
    $region33: #{tpu_custom_call.1} parent=1 // pred_fallthru
      _
    // Predicated region
    $region34: #{tpu_custom_call.1} parent=1 // pred_check
      _
    $region35: #{tpu_custom_call.1} parent=1 // pred_check_branch
      %453 = sbr.rel (0) target = $region37
    $region36: #{tpu_custom_call.1} parent=1 // pred_region
      %s455 = ssub.s32 256, 256
      %456 = vsyncadd [#allocation7], %s455
      %s457 = sshll.u32 [#allocation11], 4
      %s458 = int_to_ptr.vmem [resolvable:$true] %s457
      %463 = dma.vmem_to_hbm [thread:$0]  %s458, 256, %s3, [#allocation7], 128, 128, 8
    $region37: #{tpu_custom_call.1} parent=1 // pred_fallthru
      _
    // Predicated region
    $region38: #{tpu_custom_call.1} parent=1 // pred_check
      _
    $region39: #{tpu_custom_call.1} parent=1 // pred_check_branch
      %465 = sbr.rel (0) target = $region41
    $region40: #{tpu_custom_call.1} parent=1 // pred_region
      %466 = dma.done [#allocation7], 256
    $region41: #{tpu_custom_call.1} parent=1 // pred_fallthru
      _
    %467 = vsyncpa [#allocation6], 1
    %468 = vsyncpa [#allocation9], 1
    %469 = vsyncpa [#allocation7], 1

</llo_original>
